<compile_context>
chip_gen: v6e
topology: v6e:2x2x1
jax: 0.10.0
libtpu: 0.0.40
codegen_flags: <defaults>
</compile_context>

<pallas_src>
import jax
import jax.numpy as jnp
from jax.experimental import pallas as pl
from jax.experimental.pallas import tpu as pltpu

LANE = 128
SUBLANE = 8


def _round_up(x, m):
    return ((x + m - 1) // m) * m


def _logreg_kernel(x_ref, w_ref, b_ref, o_ref):
    # MXU matmul with f32 accumulation + VPU bias broadcast-add.
    acc = jnp.dot(x_ref[...], w_ref[...], preferred_element_type=jnp.float32)
    o_ref[...] = (acc + b_ref[...]).astype(o_ref.dtype)


def prepare_logreg_params(weight, bias):
    """One-time param prep: transpose PyTorch-layout weight to (ft_in, N_pad)
    and pad classes to a lane-dense multiple of 128. Do this once at init, not
    per forward call."""
    nb_classes, ft_in = weight.shape
    n_pad = _round_up(nb_classes, LANE)
    w_t = jnp.zeros((ft_in, n_pad), weight.dtype).at[:, :nb_classes].set(weight.T)
    b2d = jnp.zeros((1, n_pad), bias.dtype).at[0, :nb_classes].set(bias)
    return w_t, b2d, nb_classes


def logreg_forward(x, w_t, b2d, nb_classes, *, tb=None):
    """LogReg forward: fc(seq) = seq @ weight.T + bias.

    x:   (B, ft_in)        float32
    w_t: (ft_in, N_pad)    pre-transposed, class-padded weight
    b2d: (1, N_pad)        class-padded bias
    returns (B, nb_classes)
    """
    B, ft_in = x.shape
    n_pad = w_t.shape[1]

    # Choose a batch tile: as large as possible while keeping double-buffered
    # x/out tiles (plus the resident weight) well inside VMEM on every TPU gen.
    if tb is None:
        bytes_per_row = (ft_in + n_pad) * x.dtype.itemsize
        tb = max(SUBLANE, min(512, (8 * 1024 * 1024) // max(bytes_per_row, 1)))
        tb = _round_up(min(tb, _round_up(B, SUBLANE)), SUBLANE)

    b_pad = _round_up(B, tb)
    if b_pad != B:
        x = jnp.pad(x, ((0, b_pad - B), (0, 0)))

    grid = (b_pad // tb,)

    out = pl.pallas_call(
        _logreg_kernel,
        out_shape=jax.ShapeDtypeStruct((b_pad, n_pad), x.dtype),
        grid=grid,
        in_specs=[
            pl.BlockSpec((tb, ft_in), lambda i: (i, 0)),      # x: walks batch
            pl.BlockSpec((ft_in, n_pad), lambda i: (0, 0)),   # weight: resident
            pl.BlockSpec((1, n_pad), lambda i: (0, 0)),       # bias: resident
        ],
        out_specs=pl.BlockSpec((tb, n_pad), lambda i: (i, 0)),
        compiler_params=pltpu.CompilerParams(
            dimension_semantics=("parallel",),   # shard batch tiles across TCs (v7x)
            vmem_limit_bytes=64 * 1024 * 1024,
        ),
    )(x, w_t, b2d)

    return out[:B, :nb_classes]


def init_logreg_params(key, ft_in, nb_classes):
    """Xavier-uniform weight init + zero bias (matches weights_init)."""
    limit = (6.0 / (ft_in + nb_classes)) ** 0.5
    weight = jax.random.uniform(
        key, (nb_classes, ft_in), dtype=jnp.float32, minval=-limit, maxval=limit
    )
    bias = jnp.zeros((nb_classes,), dtype=jnp.float32)
    return weight, bias


if __name__ == "__main__":
    key = jax.random.PRNGKey(0)
    k_w, k_x = jax.random.split(key)

    batch, ft_in, nb_classes = 8, 32, 16
    weight, bias = init_logreg_params(k_w, ft_in, nb_classes)
    x = jax.random.normal(k_x, (batch, ft_in), dtype=jnp.float32)

    # One-time param prep (transpose + lane padding), then forward.
    w_t, b2d, n_cls = prepare_logreg_params(weight, bias)
    out = logreg_forward(x, w_t, b2d, n_cls)
    jax.block_until_ready(out)

    # Reference check against plain JAX (PyTorch nn.Linear semantics).
    ref = x @ weight.T + bias
    assert out.shape == (batch, nb_classes)
    assert jnp.allclose(out, ref, atol=1e-5, rtol=1e-5)

    print("KERNEL_OK")
</pallas_src>

<mosaic_0001>
module attributes {stable_mosaic.version = 11 : i64} {
  func.func @_logreg_kernel(%arg0: i32, %arg1: memref<8x32xf32, #tpu.memory_space<vmem>>, %arg2: memref<32x128xf32, #tpu.memory_space<vmem>>, %arg3: memref<1x128xf32, #tpu.memory_space<vmem>>, %arg4: memref<8x128xf32, #tpu.memory_space<vmem>>) attributes {dimension_semantics = [#tpu.dimension_semantics<parallel>], iteration_bounds = array<i64: 1>, scalar_prefetch = 0 : i64, scratch_operands = 0 : i64, tpu.core_type = #tpu.core_type<tc>, window_params = [{transform_indices = @transform_0, window_bounds = array<i64: 8, 32>}, {pipeline_mode = #tpu.pipeline_mode<synchronous>, transform_indices = @transform_1, window_bounds = array<i64: 32, 128>}, {pipeline_mode = #tpu.pipeline_mode<synchronous>, transform_indices = @transform_2, window_bounds = array<i64: 1, 128>}, {transform_indices = @transform_3, window_bounds = array<i64: 8, 128>}]} {
    %c0 = arith.constant 0 : index
    %c0_0 = arith.constant 0 : index
    %0 = vector.load %arg1[%c0, %c0_0] : memref<8x32xf32, #tpu.memory_space<vmem>>, vector<8x32xf32>
    %c0_1 = arith.constant 0 : index
    %c0_2 = arith.constant 0 : index
    %1 = vector.load %arg2[%c0_1, %c0_2] : memref<32x128xf32, #tpu.memory_space<vmem>>, vector<32x128xf32>
    %cst = arith.constant dense<0.000000e+00> : vector<8x128xf32>
    %2 = tpu.matmul %0, %1, %cst {dimension_numbers = #tpu.dot_dimension_numbers<[1], [0], [0], [1], [0, 0, 1, 1], [], []>} : vector<8x32xf32>, vector<32x128xf32>, vector<8x128xf32> -> vector<8x128xf32>
    %c0_3 = arith.constant 0 : index
    %c0_4 = arith.constant 0 : index
    %3 = vector.load %arg3[%c0_3, %c0_4] : memref<1x128xf32, #tpu.memory_space<vmem>>, vector<1x128xf32>
    %4 = vector.broadcast %3 : vector<1x128xf32> to vector<8x128xf32>
    %5 = arith.addf %2, %4 : vector<8x128xf32>
    %c0_5 = arith.constant 0 : index
    %c0_6 = arith.constant 0 : index
    %6 = vector.load %arg4[%c0_5, %c0_6] : memref<8x128xf32, #tpu.memory_space<vmem>>, vector<8x128xf32>
    tpu.vector_store %arg4[%c0_5, %c0_6], %5 {strides = array<i32>} : memref<8x128xf32, #tpu.memory_space<vmem>>, vector<8x128xf32>,
    return
  }
  func.func @transform_0(%arg0: i32) -> (i32, i32) {
    %c0_i32 = arith.constant 0 : i32
    %c0_i32_0 = arith.constant 0 : i32
    return %arg0, %c0_i32 : i32, i32
  }
  func.func @transform_1(%arg0: i32) -> (i32, i32) {
    %c0_i32 = arith.constant 0 : i32
    %c0_i32_0 = arith.constant 0 : i32
    %c0_i32_1 = arith.constant 0 : i32
    return %c0_i32, %c0_i32_0 : i32, i32
  }
  func.func @transform_2(%arg0: i32) -> (i32, i32) {
    %c0_i32 = arith.constant 0 : i32
    %c0_i32_0 = arith.constant 0 : i32
    %c0_i32_1 = arith.constant 0 : i32
    return %c0_i32, %c0_i32_0 : i32, i32
  }
  func.func @transform_3(%arg0: i32) -> (i32, i32) {
    %c0_i32 = arith.constant 0 : i32
    %c0_i32_0 = arith.constant 0 : i32
    return %arg0, %c0_i32 : i32, i32
  }
}

</mosaic_0001>

<llo_original>
// kernel: tpu_custom_call.1
$region0: #{tpu_custom_call.1}
  #allocation0 [shape = 'u32[]', space=smem, size = 0x4, offset = 0x4, fixed_abs, tag = 'smem constant byte address 0x4 - core index']
  #allocation1 [shape = 'u32[144,128]{1,0:T(1,128)}', space=vmem, size = 0x12000, scoped, tag = 'internal scratch']
  %s0 = inlined_call_operand.hbm [shape: f32[8,32], index: 0, kind: input, shape index: {}]
  %s1 = inlined_call_operand.hbm [shape: f32[32,128], index: 1, kind: input, shape index: {}]
  %s2 = inlined_call_operand.vmem [shape: f32[1,128], index: 2, kind: input, shape index: {}]
  %s3 = inlined_call_operand.hbm [shape: f32[8,128], index: 3, kind: output, shape index: {}]
  %s4 = sld [smem:[#allocation0]]
  $region30: #{tpu_custom_call.1} parent=0
    _
  %s6 = ssub.s32 1, %s4
  %s7 = scalar_select 0, %s6, %s4
  $region1: #{tpu_custom_call.1} parent=0
    #allocation2 [shape = 'u8[4096]{0}', space=vmem, size = 0x1000, scoped, tag = 'input window, operand 0, single buffered']
    #allocation3 [shape = 's32[1]{0}', space=sflag, size = 0x4, scoped, tag = 'scoped memory for tpu_custom_call.1']
    #allocation4 [shape = 's32[1]{0}', space=sflag, size = 0x4, scoped, tag = 'scoped memory for tpu_custom_call.1']
    #allocation5 [shape = 'u8[16384]{0}', space=vmem, size = 0x4000, scoped, tag = 'input window, operand 1, single buffered']
    #allocation6 [shape = 's32[1]{0}', space=sflag, size = 0x4, scoped, tag = 'scoped memory for tpu_custom_call.1']
    #allocation7 [shape = 'u8[4096]{0}', space=vmem, size = 0x1000, scoped, tag = 'output window, operand 0, single buffered']
    %8 = vsyncpa [#allocation3], 0
    %9 = vsyncpa [#allocation6], 0
    %10 = vsyncpa [#allocation4], 0
    // Predicated region
    $region2: #{tpu_custom_call.1} parent=1 // pred_check
      _
    $region3: #{tpu_custom_call.1} parent=1 // pred_check_branch
      %12 = sbr.rel (0) target = $region5
    $region4: #{tpu_custom_call.1} parent=1 // pred_region
      %s14 = ssub.s32 128, 128
      %15 = vsyncadd [#allocation3], %s14
      %s17 = sshll.u32 [#allocation2], 4
      %s18 = int_to_ptr.vmem [resolvable:$true] %s17
      %20 = dma.hbm_to_vmem [thread:$0]  %s0, 128, %s18, [#allocation3]
    $region5: #{tpu_custom_call.1} parent=1 // pred_fallthru
      _
    // Predicated region
    $region6: #{tpu_custom_call.1} parent=1 // pred_check
      _
    $region7: #{tpu_custom_call.1} parent=1 // pred_check_branch
      %22 = sbr.rel (0) target = $region9
    $region8: #{tpu_custom_call.1} parent=1 // pred_region
      %s24 = ssub.s32 512, 512
      %25 = vsyncadd [#allocation6], %s24
      %s26 = sshll.u32 [#allocation5], 4
      %s27 = int_to_ptr.vmem [resolvable:$true] %s26
      %32 = dma.hbm_to_vmem [thread:$0]  %s1, 512, %s27, [#allocation6], 128, 128, 8
    $region9: #{tpu_custom_call.1} parent=1 // pred_fallthru
      _
    // Predicated region
    $region10: #{tpu_custom_call.1} parent=1 // pred_check
      _
    $region11: #{tpu_custom_call.1} parent=1 // pred_check_branch
      %34 = sbr.rel (0) target = $region13
    $region12: #{tpu_custom_call.1} parent=1 // pred_region
      _
    $region13: #{tpu_custom_call.1} parent=1 // pred_fallthru
      _
    // Predicated region
    $region14: #{tpu_custom_call.1} parent=1 // pred_check
      _
    $region15: #{tpu_custom_call.1} parent=1 // pred_check_branch
      %36 = sbr.rel (0) target = $region17
    $region16: #{tpu_custom_call.1} parent=1 // pred_region
      %37 = dma.done [#allocation3], 128
    $region17: #{tpu_custom_call.1} parent=1 // pred_fallthru
      _
    // Predicated region
    $region18: #{tpu_custom_call.1} parent=1 // pred_check
      _
    $region19: #{tpu_custom_call.1} parent=1 // pred_check_branch
      %39 = sbr.rel (0) target = $region21
    $region20: #{tpu_custom_call.1} parent=1 // pred_region
      %40 = dma.done [#allocation6], 512
    $region21: #{tpu_custom_call.1} parent=1 // pred_fallthru
      _
    %v41 = vld [vmem:[#allocation2] sm:$0xff]
    %v42 = vld [vmem:[#allocation5] sm:$0xff]
    %v43 = vld [vmem:[#allocation5 + $0x8] sm:$0xff]
    %v44 = vld [vmem:[#allocation5 + $0x10] sm:$0xff]
    %v45 = vld [vmem:[#allocation5 + $0x18] sm:$0xff]
    %v46 = vld [vmem:[%s2] sm:$0x1]
    %v48 = vlaneseq
    %v49 = vshrl.u32 %v48, 7
    %v50 = vsub.s32 0, %v49
    %v51 = vrot.slane %v46, %v50
    %vm53 = vcmask 261120
    %v55 = vsel %vm53, %v41, 0
    %57 = vmatprep.subr.mxu0 0.0
    %58 = vmatpush1.msra.mxu0 0.0
    %59 = vmatprep.subr.mxu0 0.0
    %60 = vmatpush1.msra.mxu0 0.0
    %61 = vmatprep.subr.mxu0 0.0
    %62 = vmatpush1.msra.mxu0 0.0
    %63 = vmatprep.subr.mxu0 0.0
    %64 = vmatpush1.msra.mxu0 0.0
    %65 = vmatprep.subr.mxu0 0.0
    %66 = vmatpush1.msra.mxu0 0.0
    %67 = vmatprep.subr.mxu0 0.0
    %68 = vmatpush1.msra.mxu0 0.0
    %69 = vmatprep.subr.mxu0 0.0
    %70 = vmatpush1.msra.mxu0 0.0
    %71 = vmatprep.subr.mxu0 0.0
    %72 = vmatpush1.msra.mxu0 0.0
    %73 = vmatprep.subr.mxu0 0.0
    %74 = vmatpush1.msra.mxu0 0.0
    %75 = vmatprep.subr.mxu0 0.0
    %76 = vmatpush1.msra.mxu0 0.0
    %77 = vmatprep.subr.mxu0 0.0
    %78 = vmatpush1.msra.mxu0 0.0
    %79 = vmatprep.subr.mxu0 0.0
    %80 = vmatpush1.msra.mxu0 0.0
    %81 = vmatprep.subr.mxu0 0.0
    %82 = vmatpush1.msra.mxu0 %v45
    %83 = vmatprep.subr.mxu0 0.0
    %84 = vmatpush1.msra.mxu0 %v44
    %85 = vmatprep.subr.mxu0 0.0
    %86 = vmatpush1.msra.mxu0 %v43
    %87 = vmatprep.subr.mxu0 0.0
    %88 = vmatpush1.msra.mxu0 %v42
    %89 = vmatprep.subr.mxu0 0.0
    %90 = vmatpush2.msra.mxu0 0.0
    %91 = vmatprep.subr.mxu0 0.0
    %92 = vmatpush2.msra.mxu0 0.0
    %93 = vmatprep.subr.mxu0 0.0
    %94 = vmatpush2.msra.mxu0 0.0
    %95 = vmatprep.subr.mxu0 0.0
    %96 = vmatpush2.msra.mxu0 0.0
    %97 = vmatprep.subr.mxu0 0.0
    %98 = vmatpush2.msra.mxu0 0.0
    %99 = vmatprep.subr.mxu0 0.0
    %100 = vmatpush2.msra.mxu0 0.0
    %101 = vmatprep.subr.mxu0 0.0
    %102 = vmatpush2.msra.mxu0 0.0
    %103 = vmatprep.subr.mxu0 0.0
    %104 = vmatpush2.msra.mxu0 0.0
    %105 = vmatprep.subr.mxu0 0.0
    %106 = vmatpush2.msra.mxu0 0.0
    %107 = vmatprep.subr.mxu0 0.0
    %108 = vmatpush2.msra.mxu0 0.0
    %109 = vmatprep.subr.mxu0 0.0
    %110 = vmatpush2.msra.mxu0 0.0
    %111 = vmatprep.subr.mxu0 0.0
    %112 = vmatpush2.msra.mxu0 0.0
    %113 = vmatprep.subr.mxu0 0.0
    %114 = vmatpush2.msra.mxu0 0.0
    %115 = vmatprep.subr.mxu0 0.0
    %116 = vmatpush2.msra.mxu0 0.0
    %117 = vmatprep.subr.mxu0 0.0
    %118 = vmatpush2.msra.mxu0 0.0
    %119 = vmatprep.subr.mxu0 0.0
    %120 = vmatpush2.msra.mxu0 0.0
    %121 = vmatprep.mubr.f32.mxu0 0.0
    %122 = vmatmul.mubr.f32.gmra.mxu0 %v55
    %v123 = vpop.f32.mrf.mxu0
    %v124 = vadd.f32 %v51, %v123
    %v125 = vpop.f32.mrf.mxu0
    %126 = vdwg.mxu0
    %127 = vst [vmem:[#allocation7] sm:$0xff] %v124
    // Predicated region
    $region22: #{tpu_custom_call.1} parent=1 // pred_check
      _
    $region23: #{tpu_custom_call.1} parent=1 // pred_check_branch
      %129 = sbr.rel (0) target = $region25
    $region24: #{tpu_custom_call.1} parent=1 // pred_region
      %s131 = ssub.s32 128, 128
      %132 = vsyncadd [#allocation4], %s131
      %s134 = sshll.u32 [#allocation7], 4
      %s135 = int_to_ptr.vmem [resolvable:$true] %s134
      %137 = dma.vmem_to_hbm [thread:$0]  %s135, 128, %s3, [#allocation4]
    $region25: #{tpu_custom_call.1} parent=1 // pred_fallthru
      _
    // Predicated region
    $region26: #{tpu_custom_call.1} parent=1 // pred_check
      _
    $region27: #{tpu_custom_call.1} parent=1 // pred_check_branch
      %139 = sbr.rel (0) target = $region29
    $region28: #{tpu_custom_call.1} parent=1 // pred_region
      %140 = dma.done [#allocation4], 128
    $region29: #{tpu_custom_call.1} parent=1 // pred_fallthru
      _
    %141 = vsyncpa [#allocation3], 1
    %142 = vsyncpa [#allocation6], 1
    %143 = vsyncpa [#allocation4], 1

</llo_original>
